<compile_context>
chip_gen: v5e
topology: v5e:2x2
jax: 0.10.0
libtpu: 0.0.40
codegen_flags: <defaults>
</compile_context>

<pallas_src>
import functools

import jax
import jax.numpy as jnp
from jax.experimental import pallas as pl
from jax.experimental.pallas import tpu as pltpu


def _round_up(x, m):
    return (x + m - 1) // m * m


def _vmem_limit_bytes():
    """Per-generation VMEM budget (v7x: 64 MiB/TC, v5e/v6e: 128 MiB)."""
    caps = []
    try:
        caps.append(int(pltpu.get_tpu_info().vmem_capacity_bytes))
    except Exception:
        pass
    kind = ""
    try:
        kind = jax.devices()[0].device_kind.lower()
    except Exception:
        pass
    caps.append(128 * 1024 * 1024 if ("v5" in kind or "v6" in kind)
                else 64 * 1024 * 1024)   # conservative default (v7x per-core)
    cap = min(caps)
    # ~75% of physical: <= ~48 MiB on v7x, ~96 MiB on v5e/v6e; hard cap 100 MiB.
    return int(min(cap * 3 // 4, 100 * 1024 * 1024))


def gnn_block_kernel(a_ref, zc_ref, dr_ref, bc_ref, r_ref, o_ref, acc_ref, *,
                     tk, zc_resident):
    """Tiled fused GCN propagation + ReLU + residual add.

    a_ref  : [TM, TK]          int8 adjacency tile (rows = targets, cols = sources)
    zc_ref : [N_PC or TK, OUTP] bf16 column-scaled transformed features dinv[j]*(X@Wc)[j]
    dr_ref : [TM, 1]           f32 row-side degree scale dinv[i]
    bc_ref : [1, OUTP]         f32 GCNConv bias
    r_ref  : [TM, OUTP]        f32 residual projection rows  X @ Wp + bp
    o_ref  : [TM, OUTP]        f32 output tile
    acc_ref: [TM, OUTP]        f32 VMEM accumulator scratch
    """
    k = pl.program_id(1)

    @pl.when(k == 0)
    def _():
        acc_ref[...] = jnp.zeros_like(acc_ref)

    # Dequant-on-load: int8 -> f32 -> bf16 (cheap VPU casts, kernel is HBM-bound;
    # halves the dominant A stream vs bf16 storage).
    a = a_ref[...].astype(jnp.float32).astype(jnp.bfloat16)
    if zc_resident:
        zc = zc_ref[pl.ds(pl.multiple_of(k * tk, tk), tk), :]  # VMEM-resident slice
    else:
        zc = zc_ref[...]                                        # streamed per-k tile
    acc_ref[...] += jnp.dot(a, zc, preferred_element_type=jnp.float32)

    @pl.when(k == pl.num_programs(1) - 1)
    def _():
        h = dr_ref[...] * acc_ref[...] + bc_ref[...]   # finish sym-norm + conv bias
        h = jnp.maximum(h, 0.0)                        # Identity norm + ReLU
        # Dropout in eval mode == identity.
        o_ref[...] = (h + r_ref[...]).astype(o_ref.dtype)


def build_adjacency(edge_index, num_nodes, n_rows, n_cols, a_dtype):
    """Adjacency built directly in the kernel dtype + D^-1/2 via edge segment-sums.

    Matches PyG gcn_norm / add_remaining_self_loops: nodes that already have a
    self loop keep its accumulated weight; others get a self loop of weight 1.
    Note: duplicate-edge multiplicities must stay <= 127 for exact int8 storage.
    """
    src = edge_index[0]
    dst = edge_index[1]
    a = jnp.zeros((n_rows, n_cols), a_dtype).at[dst, src].add(
        jnp.ones(src.shape, a_dtype))                  # message flows src -> dst
    self_cnt = jnp.zeros((num_nodes,), jnp.int32).at[dst].add(
        (src == dst).astype(jnp.int32))
    has_self = self_cnt > 0
    idx = jnp.arange(num_nodes)
    a = a.at[idx, idx].add(jnp.where(has_self, 0, 1).astype(a_dtype))
    # In-degree incl. self loops -- O(E), no dense row-sum pass.
    deg = jnp.zeros((num_nodes,), jnp.float32).at[dst].add(1.0)
    deg = deg + jnp.where(has_self, 0.0, 1.0)
    dinv = jnp.where(deg > 0.0, jax.lax.rsqrt(deg), 0.0)
    return a, dinv


@functools.partial(jax.jit,
                   static_argnames=("num_nodes", "tm_override", "tk_override",
                                    "force_stream_zc"))
def _forward_impl(x, edge_index, wc, bc, wp, bp, *, num_nodes,
                  tm_override=None, tk_override=None, force_stream_zc=False):
    n = num_nodes
    out_dim = wc.shape[1]
    out_p = _round_up(out_dim, 128)                    # lane-dense output

    vmem_limit = _vmem_limit_bytes()

    # ---- pick tiles first, then pad N up to tile multiples ----
    tk_max = 4096 if vmem_limit >= 64 * 1024 * 1024 else 2048
    tk = tk_override if tk_override is not None else min(tk_max, _round_up(n, 128))
    tk = _round_up(tk, 128)

    if tm_override is not None:
        tm = tm_override
    else:
        tm = 512
        # Shrink so the "parallel" row axis gets >= 2 tiles on small graphs
        # (v7x megacore); >= 32 keeps int8 sublane packing happy.
        while tm > 32 and _round_up(n, tm) < 2 * tm:
            tm //= 2
    tm = max(32, _round_up(tm, 32))

    n_pr = _round_up(n, tm)            # padded rows (targets)
    n_pc = _round_up(n, tk)            # padded cols (sources / reduction)

    # ---- VMEM budgeting: keep Zc resident when it fits comfortably ----
    a_bytes = 2 * tm * tk                               # int8 A, double-buffered
    row_bytes = (2 * 2 + 1) * tm * out_p * 4            # r + out double-buf + acc
    zc_bytes = n_pc * out_p * 2
    zc_resident = (not force_stream_zc) and \
        (a_bytes + row_bytes + zc_bytes) <= int(vmem_limit * 0.6)

    # ---- graph glue: int8 adjacency + D^-1/2 (no dense f32 intermediate) ----
    a_pad, dinv = build_adjacency(edge_index, n, n_pr, n_pc, jnp.int8)

    # ---- fused feature transform, computed exactly once: Z = X @ [Wc || Wp] ----
    w_fused = jnp.concatenate([wc, wp], axis=1).astype(jnp.bfloat16)
    z = jnp.dot(x.astype(jnp.bfloat16), w_fused,
                preferred_element_type=jnp.float32)     # [n, 2*out_dim] f32
    zc = z[:, :out_dim] * dinv[:, None]                 # fold column-side D^-1/2
    r = z[:, out_dim:] + bp                             # residual projection + bias

    # ---- pad kernel operands to TPU-friendly shapes ----
    zc_p = jnp.zeros((n_pc, out_p), jnp.bfloat16).at[:n, :out_dim].set(
        zc.astype(jnp.bfloat16))
    r_p = jnp.zeros((n_pr, out_p), jnp.float32).at[:n, :out_dim].set(r)
    dr_p = jnp.zeros((n_pr, 1), jnp.float32).at[:n, 0].set(dinv)
    bc_p = jnp.zeros((1, out_p), jnp.float32).at[:, :out_dim].set(bc)

    if zc_resident:
        zc_spec = pl.BlockSpec((n_pc, out_p), lambda i, k: (0, 0))   # DMA'd once
    else:
        zc_spec = pl.BlockSpec((tk, out_p), lambda i, k: (k, 0))     # streamed

    kernel = functools.partial(gnn_block_kernel, tk=tk, zc_resident=zc_resident)

    grid = (n_pr // tm, n_pc // tk)
    out_padded = pl.pallas_call(
        kernel,
        out_shape=jax.ShapeDtypeStruct((n_pr, out_p), jnp.float32),
        grid_spec=pltpu.PrefetchScalarGridSpec(
            num_scalar_prefetch=0,
            grid=grid,
            in_specs=[
                pl.BlockSpec((tm, tk), lambda i, k: (i, k)),      # A tile (int8)
                zc_spec,                                          # Zc
                pl.BlockSpec((tm, 1), lambda i, k: (i, 0)),       # dinv rows
                pl.BlockSpec((1, out_p), lambda i, k: (0, 0)),    # conv bias
                pl.BlockSpec((tm, out_p), lambda i, k: (i, 0)),   # residual rows
            ],
            out_specs=pl.BlockSpec((tm, out_p), lambda i, k: (i, 0)),
            scratch_shapes=[pltpu.VMEM((tm, out_p), jnp.float32)],
        ),
        compiler_params=pltpu.CompilerParams(
            dimension_semantics=("parallel", "arbitrary"),
            vmem_limit_bytes=vmem_limit,
        ),
    )(a_pad, zc_p, dr_p, bc_p, r_p)

    return out_padded[:n, :out_dim]


def gnn_block_forward(x, edge_index, params, *, tm=None, tk=None,
                      force_stream_zc=False):
    return _forward_impl(x, edge_index, params["wc"], params["bc"],
                         params["wp"], params["bp"], num_nodes=x.shape[0],
                         tm_override=tm, tk_override=tk,
                         force_stream_zc=force_stream_zc)


def init_params(key, in_dim, out_dim):
    """Deterministic synthetic init (Glorot-ish weights, PyTorch-like Linear)."""
    k1, k2, k3 = jax.random.split(key, 3)
    glorot = jnp.sqrt(6.0 / (in_dim + out_dim))
    wc = jax.random.uniform(k1, (in_dim, out_dim), jnp.float32, -glorot, glorot)
    bc = jnp.zeros((1, out_dim), jnp.float32)
    bound = 1.0 / jnp.sqrt(jnp.float32(in_dim))
    wp = jax.random.uniform(k2, (in_dim, out_dim), jnp.float32, -bound, bound)
    bp = jax.random.uniform(k3, (1, out_dim), jnp.float32, -bound, bound)
    return {"wc": wc, "bc": bc, "wp": wp, "bp": bp}


def reference_forward(x, edge_index, params):
    """Pure-JAX f32 reference of the same forward pass (for sanity check)."""
    n = x.shape[0]
    src, dst = edge_index[0], edge_index[1]
    a = jnp.zeros((n, n), jnp.float32).at[dst, src].add(1.0)
    idx = jnp.arange(n)
    diag = a[idx, idx]
    a = a.at[idx, idx].set(jnp.where(diag > 0.0, diag, 1.0))
    deg = jnp.sum(a, axis=1)
    dinv = jnp.where(deg > 0.0, jax.lax.rsqrt(deg), 0.0)
    a_norm = dinv[:, None] * a * dinv[None, :]
    h = a_norm @ (x @ params["wc"]) + params["bc"]
    h = jnp.maximum(h, 0.0)
    return h + (x @ params["wp"] + params["bp"])


def _run_case(key, num_nodes, in_dim, out_dim, num_edges, **fw_kwargs):
    kx, ke, kp = jax.random.split(key, 3)
    x = jax.random.normal(kx, (num_nodes, in_dim), jnp.float32)
    edge_index = jax.random.randint(ke, (2, num_edges), 0, num_nodes, jnp.int32)
    params = init_params(kp, in_dim, out_dim)

    out = jax.block_until_ready(gnn_block_forward(x, edge_index, params, **fw_kwargs))
    ref = reference_forward(x, edge_index, params)

    assert out.shape == (num_nodes, out_dim)
    # bf16 MXU operands -> compare to the f32 reference with a loose tolerance.
    assert jnp.allclose(out, ref, atol=5e-2, rtol=5e-2), (
        float(jnp.max(jnp.abs(out - ref))))


if __name__ == "__main__":
    key = jax.random.PRNGKey(0)
    k1, k2, k3, k4 = jax.random.split(key, 4)

    # Tiny case matching the module's typical small dims (single grid step).
    _run_case(k1, num_nodes=16, in_dim=8, out_dim=32, num_edges=40)
    # Medium case: 2 row tiles (megacore-splittable), single reduction step,
    # VMEM-resident Zc.
    _run_case(k2, num_nodes=300, in_dim=12, out_dim=48, num_edges=900)
    # Force a small tk to exercise the multi-step reduction accumulator and the
    # in-kernel pl.ds slicing of the resident Zc.
    _run_case(k3, num_nodes=300, in_dim=12, out_dim=48, num_edges=900, tk=128)
    # Exercise the streamed-Zc fallback path (used for graphs too large for VMEM).
    _run_case(k4, num_nodes=300, in_dim=12, out_dim=48, num_edges=900, tk=128,
              force_stream_zc=True)

    print("KERNEL_OK")
</pallas_src>

<mosaic_0001>
module attributes {stable_mosaic.version = 11 : i64} {
  func.func @gnn_block_kernel(%arg0: i32, %arg1: i32, %arg2: memref<32x128xi8, #tpu.memory_space<vmem>>, %arg3: memref<128x128xbf16, #tpu.memory_space<vmem>>, %arg4: memref<32x1xf32, #tpu.memory_space<vmem>>, %arg5: memref<1x128xf32, #tpu.memory_space<vmem>>, %arg6: memref<32x128xf32, #tpu.memory_space<vmem>>, %arg7: memref<32x128xf32, #tpu.memory_space<vmem>>, %arg8: memref<32x128xf32, #tpu.memory_space<vmem>>) attributes {dimension_semantics = [#tpu.dimension_semantics<parallel>, #tpu.dimension_semantics<arbitrary>], iteration_bounds = array<i64: 1, 1>, scalar_prefetch = 0 : i64, scratch_operands = 1 : i64, tpu.core_type = #tpu.core_type<tc>, window_params = [{transform_indices = @transform_0, window_bounds = array<i64: 32, 128>}, {pipeline_mode = #tpu.pipeline_mode<synchronous>, transform_indices = @transform_1, window_bounds = array<i64: 128, 128>}, {transform_indices = @transform_2, window_bounds = array<i64: 32, 1>}, {pipeline_mode = #tpu.pipeline_mode<synchronous>, transform_indices = @transform_3, window_bounds = array<i64: 1, 128>}, {transform_indices = @transform_4, window_bounds = array<i64: 32, 128>}, {transform_indices = @transform_5, window_bounds = array<i64: 32, 128>}]} {
    %c0_i32 = arith.constant 0 : i32
    %0 = arith.cmpi eq, %arg1, %c0_i32 : i32
    %1 = arith.extui %0 : i1 to i32
    %c0_i32_0 = arith.constant 0 : i32
    %2 = arith.cmpi ne, %1, %c0_i32_0 : i32
    scf.if %2 {
      %cst_9 = arith.constant 0.000000e+00 : f32
      %17 = vector.broadcast %cst_9 : f32 to vector<32x128xf32>
      %c0_10 = arith.constant 0 : index
      %c0_11 = arith.constant 0 : index
      %18 = vector.load %arg8[%c0_10, %c0_11] : memref<32x128xf32, #tpu.memory_space<vmem>>, vector<32x128xf32>
      tpu.vector_store %arg8[%c0_10, %c0_11], %17 {strides = array<i32>} : memref<32x128xf32, #tpu.memory_space<vmem>>, vector<32x128xf32>,
    } else {
    }
    %c0 = arith.constant 0 : index
    %c0_1 = arith.constant 0 : index
    %3 = vector.load %arg2[%c0, %c0_1] : memref<32x128xi8, #tpu.memory_space<vmem>>, vector<32x128xi8>
    %4 = arith.sitofp %3 : vector<32x128xi8> to vector<32x128xf32>
    %5 = arith.truncf %4 : vector<32x128xf32> to vector<32x128xbf16>
    %c128_i32 = arith.constant 128 : i32
    %6 = arith.muli %arg1, %c128_i32 : i32
    %7 = tpu.assume_multiple %6, 128 : i32
    %8 = arith.index_cast %7 : i32 to index
    %c0_2 = arith.constant 0 : index
    %9 = vector.load %arg3[%8, %c0_2] : memref<128x128xbf16, #tpu.memory_space<vmem>>, vector<128x128xbf16>
    %c0_3 = arith.constant 0 : index
    %c0_4 = arith.constant 0 : index
    %10 = vector.load %arg8[%c0_3, %c0_4] : memref<32x128xf32, #tpu.memory_space<vmem>>, vector<32x128xf32>
    %cst = arith.constant dense<0.000000e+00> : vector<32x128xf32>
    %11 = tpu.matmul %5, %9, %cst {dimension_numbers = #tpu.dot_dimension_numbers<[1], [0], [0], [1], [0, 0, 1, 1], [], []>} : vector<32x128xbf16>, vector<128x128xbf16>, vector<32x128xf32> -> vector<32x128xf32>
    %12 = arith.addf %10, %11 : vector<32x128xf32>
    %c0_5 = arith.constant 0 : index
    %c0_6 = arith.constant 0 : index
    %13 = vector.load %arg8[%c0_5, %c0_6] : memref<32x128xf32, #tpu.memory_space<vmem>>, vector<32x128xf32>
    tpu.vector_store %arg8[%c0_5, %c0_6], %12 {strides = array<i32>} : memref<32x128xf32, #tpu.memory_space<vmem>>, vector<32x128xf32>,
    %c0_i32_7 = arith.constant 0 : i32
    %14 = arith.cmpi eq, %arg1, %c0_i32_7 : i32
    %15 = arith.extui %14 : i1 to i32
    %c0_i32_8 = arith.constant 0 : i32
    %16 = arith.cmpi ne, %15, %c0_i32_8 : i32
    scf.if %16 {
      %c0_9 = arith.constant 0 : index
      %c0_10 = arith.constant 0 : index
      %17 = vector.load %arg4[%c0_9, %c0_10] : memref<32x1xf32, #tpu.memory_space<vmem>>, vector<32x1xf32>
      %c0_11 = arith.constant 0 : index
      %c0_12 = arith.constant 0 : index
      %18 = vector.load %arg8[%c0_11, %c0_12] : memref<32x128xf32, #tpu.memory_space<vmem>>, vector<32x128xf32>
      %19 = vector.broadcast %17 : vector<32x1xf32> to vector<32x128xf32>
      %20 = arith.mulf %19, %18 : vector<32x128xf32>
      %c0_13 = arith.constant 0 : index
      %c0_14 = arith.constant 0 : index
      %21 = vector.load %arg5[%c0_13, %c0_14] : memref<1x128xf32, #tpu.memory_space<vmem>>, vector<1x128xf32>
      %22 = vector.broadcast %21 : vector<1x128xf32> to vector<32x128xf32>
      %23 = arith.addf %20, %22 : vector<32x128xf32>
      %cst_15 = arith.constant 0.000000e+00 : f32
      %24 = vector.broadcast %cst_15 : f32 to vector<32x128xf32>
      %25 = arith.maximumf %23, %24 : vector<32x128xf32>
      %c0_16 = arith.constant 0 : index
      %c0_17 = arith.constant 0 : index
      %26 = vector.load %arg6[%c0_16, %c0_17] : memref<32x128xf32, #tpu.memory_space<vmem>>, vector<32x128xf32>
      %27 = arith.addf %25, %26 : vector<32x128xf32>
      %c0_18 = arith.constant 0 : index
      %c0_19 = arith.constant 0 : index
      %28 = vector.load %arg7[%c0_18, %c0_19] : memref<32x128xf32, #tpu.memory_space<vmem>>, vector<32x128xf32>
      tpu.vector_store %arg7[%c0_18, %c0_19], %27 {strides = array<i32>} : memref<32x128xf32, #tpu.memory_space<vmem>>, vector<32x128xf32>,
    } else {
    }
    return
  }
  func.func @transform_0(%arg0: i32, %arg1: i32) -> (i32, i32) {
    %c0_i32 = arith.constant 0 : i32
    return %arg0, %arg1 : i32, i32
  }
  func.func @transform_1(%arg0: i32, %arg1: i32) -> (i32, i32) {
    %c0_i32 = arith.constant 0 : i32
    %c0_i32_0 = arith.constant 0 : i32
    %c0_i32_1 = arith.constant 0 : i32
    return %c0_i32, %c0_i32_0 : i32, i32
  }
  func.func @transform_2(%arg0: i32, %arg1: i32) -> (i32, i32) {
    %c0_i32 = arith.constant 0 : i32
    %c0_i32_0 = arith.constant 0 : i32
    return %arg0, %c0_i32 : i32, i32
  }
  func.func @transform_3(%arg0: i32, %arg1: i32) -> (i32, i32) {
    %c0_i32 = arith.constant 0 : i32
    %c0_i32_0 = arith.constant 0 : i32
    %c0_i32_1 = arith.constant 0 : i32
    return %c0_i32, %c0_i32_0 : i32, i32
  }
  func.func @transform_4(%arg0: i32, %arg1: i32) -> (i32, i32) {
    %c0_i32 = arith.constant 0 : i32
    %c0_i32_0 = arith.constant 0 : i32
    return %arg0, %c0_i32 : i32, i32
  }
  func.func @transform_5(%arg0: i32, %arg1: i32) -> (i32, i32) {
    %c0_i32 = arith.constant 0 : i32
    %c0_i32_0 = arith.constant 0 : i32
    return %arg0, %c0_i32 : i32, i32
  }
}

</mosaic_0001>

<llo_original>
// kernel: _forward_impl.1
$region0: #{_forward_impl.1}
  #allocation0 [shape = 'u32[]', space=smem, size = 0x4, offset = 0x4, fixed_abs, tag = 'smem constant byte address 0x4 - core index']
  #allocation1 [shape = 'u32[72,128]{1,0:T(1,128)}', space=vmem, size = 0x9000, scoped, tag = 'internal scratch']
  #allocation2 [shape = 'f32[32,128]{1,0:T(8,128)}', space=vmem, size = 0x4000, scoped, tag = 'scratch operand']
  %s0 = inlined_call_operand.vmem [shape: s8[32,128], index: 0, kind: input, shape index: {}]
  %s1 = inlined_call_operand.vmem [shape: bf16[128,128], index: 1, kind: input, shape index: {}]
  %s2 = inlined_call_operand.vmem [shape: f32[32,1], index: 2, kind: input, shape index: {}]
  %s3 = inlined_call_operand.vmem [shape: f32[1,128], index: 3, kind: input, shape index: {}]
  %s4 = inlined_call_operand.vmem [shape: f32[32,128], index: 4, kind: input, shape index: {}]
  %s5 = inlined_call_operand.vmem [shape: f32[32,128], index: 5, kind: output, shape index: {}]
  %s6 = sld [smem:[#allocation0]]
  $region38: #{_forward_impl.1} parent=0
    _
  %s8 = ssub.s32 1, %s6
  %s9 = scalar_select 0, %s8, %s6
  // Predicated region
  $region2: #{_forward_impl.1} parent=0 // pred_check
    _
  $region3: #{_forward_impl.1} parent=0 // pred_check_branch
    %11 = sbr.rel (0) target = $region5
  $region4: #{_forward_impl.1} parent=0 // pred_region
    _
  $region5: #{_forward_impl.1} parent=0 // pred_fallthru
    _
  // Predicated region
  $region6: #{_forward_impl.1} parent=0 // pred_check
    _
  $region7: #{_forward_impl.1} parent=0 // pred_check_branch
    %13 = sbr.rel (0) target = $region9
  $region8: #{_forward_impl.1} parent=0 // pred_region
    _
  $region9: #{_forward_impl.1} parent=0 // pred_fallthru
    _
  // Predicated region
  $region10: #{_forward_impl.1} parent=0 // pred_check
    _
  $region11: #{_forward_impl.1} parent=0 // pred_check_branch
    %15 = sbr.rel (0) target = $region13
  $region12: #{_forward_impl.1} parent=0 // pred_region
    _
  $region13: #{_forward_impl.1} parent=0 // pred_fallthru
    _
  // Predicated region
  $region14: #{_forward_impl.1} parent=0 // pred_check
    _
  $region15: #{_forward_impl.1} parent=0 // pred_check_branch
    %17 = sbr.rel (0) target = $region17
  $region16: #{_forward_impl.1} parent=0 // pred_region
    _
  $region17: #{_forward_impl.1} parent=0 // pred_fallthru
    _
  // Predicated region
  $region18: #{_forward_impl.1} parent=0 // pred_check
    _
  $region19: #{_forward_impl.1} parent=0 // pred_check_branch
    %19 = sbr.rel (0) target = $region21
  $region20: #{_forward_impl.1} parent=0 // pred_region
    _
  $region21: #{_forward_impl.1} parent=0 // pred_fallthru
    _
  %p20 = scmp.eq.s32.totalorder 0, 0
  // Predicated region
  $region22: #{_forward_impl.1} parent=0 // pred_check
    %p21 = pneg %p20
  $region23: #{_forward_impl.1} parent=0 // pred_check_branch
    %23 = sbr.rel (%p21) target = $region25
  $region24: #{_forward_impl.1} parent=0 // pred_region
    %24 = vst [vmem:[#allocation2] sm:$0xff] 0.0
    %25 = vst [vmem:[#allocation2 + $0x8] sm:$0xff] 0.0
    %26 = vst [vmem:[#allocation2 + $0x10] sm:$0xff] 0.0
    %27 = vst [vmem:[#allocation2 + $0x18] sm:$0xff] 0.0
  $region25: #{_forward_impl.1} parent=0 // pred_fallthru
    _
  %v28 = vld [vmem:[%s0] sm:$0x3]
  %v29 = vld [vmem:[%s0 + $0x2] sm:$0x3]
  %v30 = vld [vmem:[%s0 + $0x4] sm:$0x3]
  %v31 = vld [vmem:[%s0 + $0x6] sm:$0x3]
  %v32 = vunpack.c.0.s8 %v28
  %v33 = vunpack.c.0.s8 %v29
  %v34 = vunpack.c.0.s8 %v30
  %v35 = vunpack.c.0.s8 %v31
  %v36 = vcvt.s32.f32 %v32
  %v37 = vcvt.s32.f32 %v33
  %v38 = vcvt.s32.f32 %v34
  %v39 = vcvt.s32.f32 %v35
  %v40 = vpack.c.bf16 %v37, %v36
  %v41 = vpack.c.bf16 %v39, %v38
  %s42 = smul.u32 0, 128
  %s43 = sshra.s32 %s42, 3
  %s44 = sand.u32 %s42, 7
  %s45 = smul.addr %s43, 4
  %s46 = scalar_lea.vmem %s1, %s45
  %v47 = vld [vmem:[%s46] sm:$0xf]
  %v48 = vld [vmem:[%s46 + $0x4] sm:$0xf]
  %v49 = vld [vmem:[%s46 + $0x8] sm:$0xf]
  %v50 = vld [vmem:[%s46 + $0xc] sm:$0xf]
  %v51 = vld [vmem:[%s46 + $0x10] sm:$0xf]
  %v52 = vld [vmem:[%s46 + $0x14] sm:$0xf]
  %v53 = vld [vmem:[%s46 + $0x18] sm:$0xf]
  %v54 = vld [vmem:[%s46 + $0x1c] sm:$0xf]
  %v55 = vld [vmem:[%s46 + $0x20] sm:$0xf]
  %v56 = vld [vmem:[%s46 + $0x24] sm:$0xf]
  %v57 = vld [vmem:[%s46 + $0x28] sm:$0xf]
  %v58 = vld [vmem:[%s46 + $0x2c] sm:$0xf]
  %v59 = vld [vmem:[%s46 + $0x30] sm:$0xf]
  %v60 = vld [vmem:[%s46 + $0x34] sm:$0xf]
  %v61 = vld [vmem:[%s46 + $0x38] sm:$0xf]
  %v62 = vld [vmem:[%s46 + $0x3c] sm:$0xf]
  %v63 = vld [vmem:[#allocation2] sm:$0xff]
  %v64 = vld [vmem:[#allocation2 + $0x8] sm:$0xff]
  %v65 = vld [vmem:[#allocation2 + $0x10] sm:$0xff]
  %v66 = vld [vmem:[#allocation2 + $0x18] sm:$0xff]
  %v83 = vunpack.c.l.b16 %v47
  %v84 = vunpack.c.l.b16 %v48
  %v85 = vunpack.c.l.b16 %v49
  %v86 = vunpack.c.l.b16 %v50
  %v87 = vunpack.c.l.b16 %v51
  %v88 = vunpack.c.l.b16 %v52
  %v89 = vunpack.c.l.b16 %v53
  %v90 = vunpack.c.l.b16 %v54
  %v91 = vunpack.c.l.b16 %v55
  %v92 = vunpack.c.l.b16 %v56
  %v93 = vunpack.c.l.b16 %v57
  %v94 = vunpack.c.l.b16 %v58
  %v95 = vunpack.c.l.b16 %v59
  %v96 = vunpack.c.l.b16 %v60
  %v97 = vunpack.c.l.b16 %v61
  %v98 = vunpack.c.l.b16 %v62
  %v99 = vpack.c.b16 %v84, %v83
  %v100 = vpack.c.b16 %v86, %v85
  %v101 = vpack.c.b16 %v88, %v87
  %v102 = vpack.c.b16 %v90, %v89
  %v103 = vpack.c.b16 %v92, %v91
  %v104 = vpack.c.b16 %v94, %v93
  %v105 = vpack.c.b16 %v96, %v95
  %v106 = vpack.c.b16 %v98, %v97
  %115 = vmatpush.bf16.msra.mxu0 %v106
  %116 = vmatpush.bf16.msra.mxu0 %v105
  %117 = vmatpush.bf16.msra.mxu0 %v104
  %118 = vmatpush.bf16.msra.mxu0 %v103
  %119 = vmatpush.bf16.msra.mxu0 %v102
  %120 = vmatpush.bf16.msra.mxu0 %v101
  %121 = vmatpush.bf16.msra.mxu0 %v100
  %122 = vmatpush.bf16.msra.mxu0 %v99
  %123 = vmatmul.bf16.gmra.mxu0 %v40
  %v124 = vpop.f32.mrf.mxu0
  %v125 = vadd.f32 0.0, %v124
  %v126 = vpop.f32.mrf.mxu0
  %v127 = vadd.f32 0.0, %v126
  %128 = vmatmul.bf16.gmra.mxu0 %v41
  %v129 = vpop.f32.mrf.mxu0
  %v130 = vadd.f32 0.0, %v129
  %v131 = vpop.f32.mrf.mxu0
  %v132 = vadd.f32 0.0, %v131
  %133 = vdwg.mxu0
  %v134 = vadd.f32 %v63, %v125
  %v135 = vadd.f32 %v64, %v127
  %v136 = vadd.f32 %v65, %v130
  %v137 = vadd.f32 %v66, %v132
  %138 = vst [vmem:[#allocation2] sm:$0xff] %v134
  %139 = vst [vmem:[#allocation2 + $0x8] sm:$0xff] %v135
  %140 = vst [vmem:[#allocation2 + $0x10] sm:$0xff] %v136
  %141 = vst [vmem:[#allocation2 + $0x18] sm:$0xff] %v137
  // Predicated region
  $region26: #{_forward_impl.1} parent=0 // pred_check
    %p142 = pneg %p20
  $region27: #{_forward_impl.1} parent=0 // pred_check_branch
    %144 = sbr.rel (%p142) target = $region29
  $region28: #{_forward_impl.1} parent=0 // pred_region
    %v145 = vld [vmem:[%s2] sm:$0xff]
    %v146 = vld [vmem:[%s2 + $0x8] sm:$0xff]
    %v147 = vld [vmem:[%s2 + $0x10] sm:$0xff]
    %v148 = vld [vmem:[%s2 + $0x18] sm:$0xff]
    %v149 = vld [vmem:[#allocation2] sm:$0xff]
    %v150 = vld [vmem:[#allocation2 + $0x8] sm:$0xff]
    %v151 = vld [vmem:[#allocation2 + $0x10] sm:$0xff]
    %v152 = vld [vmem:[#allocation2 + $0x18] sm:$0xff]
    %154 = vset.pattern.permute.xlu0 0
    %155 = vperm.xlu0 %154, %v145
    %v156 = vpop.permute.xlu0 %155
    %159 = vset.pattern.permute.xlu0 0
    %160 = vperm.xlu0 %159, %v146
    %v161 = vpop.permute.xlu0 %160
    %164 = vset.pattern.permute.xlu0 0
    %165 = vperm.xlu0 %164, %v147
    %v166 = vpop.permute.xlu0 %165
    %169 = vset.pattern.permute.xlu0 0
    %170 = vperm.xlu0 %169, %v148
    %v171 = vpop.permute.xlu0 %170
    %v173 = vmul.f32 %v156, %v149
    %v174 = vmul.f32 %v161, %v150
    %v175 = vmul.f32 %v166, %v151
    %v176 = vmul.f32 %v171, %v152
    %v177 = vld [vmem:[%s3] sm:$0x1]
    %v179 = vperm.slane %v177, 0
    %v181 = vadd.f32 %v173, %v179
    %v182 = vadd.f32 %v174, %v179
    %v183 = vadd.f32 %v175, %v179
    %v184 = vadd.f32 %v176, %v179
    %v185 = vmax.f32 %v181, 0.0
    %v186 = vmax.f32 %v182, 0.0
    %v187 = vmax.f32 %v183, 0.0
    %v188 = vmax.f32 %v184, 0.0
    %v189 = vld [vmem:[%s4] sm:$0xff]
    %v190 = vld [vmem:[%s4 + $0x8] sm:$0xff]
    %v191 = vld [vmem:[%s4 + $0x10] sm:$0xff]
    %v192 = vld [vmem:[%s4 + $0x18] sm:$0xff]
    %v193 = vadd.f32 %v185, %v189
    %v194 = vadd.f32 %v186, %v190
    %v195 = vadd.f32 %v187, %v191
    %v196 = vadd.f32 %v188, %v192
    %197 = vst [vmem:[%s5] sm:$0xff] %v193
    %198 = vst [vmem:[%s5 + $0x8] sm:$0xff] %v194
    %199 = vst [vmem:[%s5 + $0x10] sm:$0xff] %v195
    %200 = vst [vmem:[%s5 + $0x18] sm:$0xff] %v196
  $region29: #{_forward_impl.1} parent=0 // pred_fallthru
    _
  // Predicated region
  $region30: #{_forward_impl.1} parent=0 // pred_check
    _
  $region31: #{_forward_impl.1} parent=0 // pred_check_branch
    %202 = sbr.rel (0) target = $region33
  $region32: #{_forward_impl.1} parent=0 // pred_region
    _
  $region33: #{_forward_impl.1} parent=0 // pred_fallthru
    _
  // Predicated region
  $region34: #{_forward_impl.1} parent=0 // pred_check
    _
  $region35: #{_forward_impl.1} parent=0 // pred_check_branch
    %204 = sbr.rel (0) target = $region37
  $region36: #{_forward_impl.1} parent=0 // pred_region
    _
  $region37: #{_forward_impl.1} parent=0 // pred_fallthru
    _

</llo_original>
